<compile_context>
chip_gen: v7x
topology: tpu7x:2x2x1
jax: 0.10.0
libtpu: 0.0.40
codegen_flags: <defaults>
</compile_context>

<pallas_src>
import numpy as np
import jax
import jax.numpy as jnp
from jax import lax
from jax.experimental import pallas as pl
from jax.experimental.pallas import tpu as pltpu

V_THRESHOLD = 1.0
DELTA_T = 0.05
TAU = 2.0
BETA = float(np.exp(-DELTA_T / TAU))        # decay factor, matches np.exp(-delta_t/tau)
ONE_MINUS_BETA = 1.0 - BETA
EPS = 1e-8

# VMEM budget target per pipelined slab (x and spikes are each double-buffered,
# so live VMEM ~ 4 * TILE bytes + mem scratch).  2 MiB slabs -> ~8.5 MiB total,
# under the 16 MiB default scoped VMEM on v5e and comfortably within v6e/v7x.
_TARGET_TILE_BYTES = 2 * 1024 * 1024


# --------------------------- LIF recurrence kernel ---------------------------
def _lif_kernel(x_ref, s_ref, mem_ref):
    """One grid step == one (N-tile, time-chunk) slab of the LIF recurrence.

    x_ref:   (TILE_T, N_TILE, D) input currents for this chunk
    s_ref:   (TILE_T, N_TILE, D) spike outputs for this chunk (float32)
    mem_ref: (N_TILE, D)         VMEM scratch: membrane potential carried
                                 across time chunks of the same N tile
    """
    # New N tile starts a fresh time sweep -> reset membrane potential.
    @pl.when(pl.program_id(1) == 0)
    def _init():
        mem_ref[...] = jnp.zeros_like(mem_ref)

    tile_t = x_ref.shape[0]

    def step(i, mem):
        # mem = beta * mem + (1 - beta) * x[t]
        x = x_ref[i].astype(jnp.float32)
        mem = BETA * mem + ONE_MINUS_BETA * x
        spike = (mem > V_THRESHOLD).astype(jnp.float32)     # matches .float()
        s_ref[i] = spike.astype(s_ref.dtype)
        return mem - V_THRESHOLD * spike

    # Membrane potential stays in vregs within the chunk; one scratch load and
    # one scratch store per chunk (instead of per time step).
    mem_final = lax.fori_loop(
        0, tile_t, step, mem_ref[...],
        unroll=True if tile_t <= 8 else 8,
    )
    mem_ref[...] = mem_final


# --------------------------- Lorentz expmap kernel ---------------------------
def _lorentz_expmap_kernel(v_ref, z_ref, zout_ref):
    """expmap_z(v) on the Lorentz hyperboloid, one (N_TILE, D) block per step."""
    v = v_ref[...].astype(jnp.float32)
    z = z_ref[...].astype(jnp.float32)

    col = lax.broadcasted_iota(jnp.int32, v.shape, dimension=1)
    sq = jnp.where(col == 0, -v * v, v * v)          # Lorentzian <v,v>_L terms
    inner = jnp.sum(sq, axis=-1, keepdims=True)      # row-wise XLU reduction
    nrm = jnp.sqrt(jnp.maximum(inner, EPS))

    # Single EUP transcendental: cosh/sinh derived from one exp.
    e = jnp.exp(nrm)
    inv_e = 1.0 / e
    cosh = 0.5 * (e + inv_e)
    sinh = 0.5 * (e - inv_e)
    zout_ref[...] = (cosh * z + (sinh / nrm) * v).astype(zout_ref.dtype)


# ------------------------------ tile selection -------------------------------
def _pick_row_tile(n, max_rows=512):
    """Largest divisor of n that is a multiple of 8 and <= max_rows, else n."""
    for cand in range(min(n, max_rows), 0, -1):
        if n % cand == 0 and cand % 8 == 0:
            return cand
    return n


def _pick_time_tile(t, n_tile, d, target_bytes=_TARGET_TILE_BYTES):
    """Largest divisor of t keeping a (t_tile, n_tile, d) f32 slab <= target."""
    per_step = n_tile * d * 4
    max_t = max(1, target_bytes // per_step)
    best = 1
    for cand in range(1, t + 1):
        if t % cand == 0 and cand <= max_t:
            best = cand
    return best


# --------------------------------- wrappers ----------------------------------
def lorentz_expmap(z_seq, v_seq, *, n_tile=None):
    """z_out = expmap_z(v) as a tiny one-shot Pallas kernel (cold path)."""
    N, D = z_seq.shape
    if n_tile is None:
        n_tile = _pick_row_tile(N)
    assert N % n_tile == 0

    return pl.pallas_call(
        _lorentz_expmap_kernel,
        out_shape=jax.ShapeDtypeStruct((N, D), z_seq.dtype),
        grid_spec=pltpu.PrefetchScalarGridSpec(
            num_scalar_prefetch=0,
            grid=(N // n_tile,),
            in_specs=[
                pl.BlockSpec((n_tile, D), lambda i: (i, 0)),   # v
                pl.BlockSpec((n_tile, D), lambda i: (i, 0)),   # z
            ],
            out_specs=pl.BlockSpec((n_tile, D), lambda i: (i, 0)),
        ),
        compiler_params=pltpu.CompilerParams(
            dimension_semantics=("parallel",),
        ),
    )(v_seq, z_seq)


def riemannian_lif_forward(x_seq, v_seq, z_seq, *, n_tile=None, t_tile=None):
    """Pallas forward pass of RiemannianLIFNode (Lorentz manifold).

    Returns (spike_seq [T, N, D] float32, z_out [N, D]).
    """
    T, N, D = x_seq.shape
    assert v_seq.shape == (N, D) and z_seq.shape == (N, D)

    if n_tile is None:
        n_tile = _pick_row_tile(N)
    if t_tile is None:
        t_tile = _pick_time_tile(T, n_tile, D)
    assert N % n_tile == 0 and T % t_tile == 0

    grid = (N // n_tile, T // t_tile)   # (parallel N tiles, sequential time chunks)

    spikes = pl.pallas_call(
        _lif_kernel,
        out_shape=jax.ShapeDtypeStruct((T, N, D), jnp.float32),
        grid_spec=pltpu.PrefetchScalarGridSpec(
            num_scalar_prefetch=0,
            grid=grid,
            in_specs=[
                pl.BlockSpec((t_tile, n_tile, D), lambda n, t: (t, n, 0)),  # x chunk
            ],
            out_specs=pl.BlockSpec((t_tile, n_tile, D), lambda n, t: (t, n, 0)),
            scratch_shapes=[pltpu.VMEM((n_tile, D), jnp.float32)],          # membrane
        ),
        compiler_params=pltpu.CompilerParams(
            # N tiles are independent (megacore-shardable); time must be sequential.
            dimension_semantics=("parallel", "arbitrary"),
        ),
    )(x_seq)

    z_out = lorentz_expmap(z_seq, v_seq)
    return spikes, z_out


# ---------------------------------------------------------------------------
# Pure-JAX reference (mirrors LIFFunction.forward) for a correctness check.
# ---------------------------------------------------------------------------
def _reference_forward(x_seq, v_seq, z_seq):
    T = x_seq.shape[0]
    mem = jnp.zeros_like(v_seq)
    spikes = []
    for t in range(T):
        mem = BETA * mem + ONE_MINUS_BETA * x_seq[t]
        sp = (mem > V_THRESHOLD).astype(jnp.float32)
        spikes.append(sp)
        mem = mem - V_THRESHOLD * sp
    out = jnp.stack(spikes, axis=0)

    v = v_seq.astype(jnp.float32)
    z = z_seq.astype(jnp.float32)
    sq = v * v
    inner = jnp.sum(sq, axis=-1, keepdims=True) - 2.0 * sq[:, :1]
    nrm = jnp.sqrt(jnp.maximum(inner, EPS))
    z_out = jnp.cosh(nrm) * z + jnp.sinh(nrm) * v / nrm
    return out, z_out.astype(z_seq.dtype)


if __name__ == "__main__":
    T, N, D = 16, 32, 128   # small, TPU-friendly demo shapes (D lane-aligned)

    key = jax.random.PRNGKey(0)
    kx, kv, kz = jax.random.split(key, 3)
    # scale x so the membrane potential actually crosses the threshold
    x_seq = jax.random.uniform(kx, (T, N, D), jnp.float32, minval=0.0, maxval=80.0)
    v_seq = 0.1 * jax.random.normal(kv, (N, D), jnp.float32)
    z_seq = 0.1 * jax.random.normal(kz, (N, D), jnp.float32)

    # Force a (2 N-tiles x 4 time-chunks) grid so the cross-chunk membrane carry
    # and the parallel N axis are exercised even at these tiny demo shapes.
    spikes, z_out = riemannian_lif_forward(x_seq, v_seq, z_seq, n_tile=16, t_tile=4)
    jax.block_until_ready((spikes, z_out))

    ref_spikes, ref_z_out = _reference_forward(x_seq, v_seq, z_seq)
    assert spikes.shape == (T, N, D) and z_out.shape == (N, D)
    np.testing.assert_allclose(np.asarray(spikes), np.asarray(ref_spikes), atol=0.0)
    np.testing.assert_allclose(np.asarray(z_out), np.asarray(ref_z_out),
                               rtol=1e-5, atol=1e-5)

    # TODO(synk): autograd backward (manifold.jacobian_expmap_v/x) is not part
    # of the forward pass and is not implemented here.
    print("KERNEL_OK")
</pallas_src>

<mosaic_0001>
module attributes {stable_mosaic.version = 11 : i64} {
  func.func @_lif_kernel(%arg0: i32, %arg1: i32, %arg2: memref<4x16x128xf32, #tpu.memory_space<vmem>>, %arg3: memref<4x16x128xf32, #tpu.memory_space<vmem>>, %arg4: memref<16x128xf32, #tpu.memory_space<vmem>>) attributes {dimension_semantics = [#tpu.dimension_semantics<parallel>, #tpu.dimension_semantics<arbitrary>], iteration_bounds = array<i64: 2, 4>, scalar_prefetch = 0 : i64, scratch_operands = 1 : i64, tpu.core_type = #tpu.core_type<tc>, window_params = [{transform_indices = @transform_0, window_bounds = array<i64: 4, 16, 128>}, {transform_indices = @transform_1, window_bounds = array<i64: 4, 16, 128>}]} {
    %c0_i32 = arith.constant 0 : i32
    %0 = arith.cmpi eq, %arg1, %c0_i32 : i32
    %1 = arith.extui %0 : i1 to i32
    %c0_i32_0 = arith.constant 0 : i32
    %2 = arith.cmpi ne, %1, %c0_i32_0 : i32
    scf.if %2 {
      %cst_36 = arith.constant 0.000000e+00 : f32
      %81 = vector.broadcast %cst_36 : f32 to vector<16x128xf32>
      %c0_37 = arith.constant 0 : index
      %c0_38 = arith.constant 0 : index
      %82 = vector.load %arg4[%c0_37, %c0_38] : memref<16x128xf32, #tpu.memory_space<vmem>>, vector<16x128xf32>
      tpu.vector_store %arg4[%c0_37, %c0_38], %81 {strides = array<i32>} : memref<16x128xf32, #tpu.memory_space<vmem>>, vector<16x128xf32>,
    } else {
    }
    %c0 = arith.constant 0 : index
    %c0_1 = arith.constant 0 : index
    %3 = vector.load %arg4[%c0, %c0_1] : memref<16x128xf32, #tpu.memory_space<vmem>>, vector<16x128xf32>
    %c0_i32_2 = arith.constant 0 : i32
    %4 = arith.index_cast %c0_i32_2 : i32 to index
    %c0_3 = arith.constant 0 : index
    %c0_4 = arith.constant 0 : index
    %5 = vector.load %arg2[%4, %c0_3, %c0_4] : memref<4x16x128xf32, #tpu.memory_space<vmem>>, vector<1x16x128xf32>
    %6 = vector.shape_cast %5 : vector<1x16x128xf32> to vector<16x128xf32>
    %cst = arith.constant 0.975309908 : f32
    %7 = vector.broadcast %cst : f32 to vector<16x128xf32>
    %8 = arith.mulf %7, %3 : vector<16x128xf32>
    %cst_5 = arith.constant 0.0246900879 : f32
    %9 = vector.broadcast %cst_5 : f32 to vector<16x128xf32>
    %10 = arith.mulf %9, %6 : vector<16x128xf32>
    %11 = arith.addf %8, %10 : vector<16x128xf32>
    %cst_6 = arith.constant 1.000000e+00 : f32
    %12 = vector.broadcast %cst_6 : f32 to vector<16x128xf32>
    %13 = arith.cmpf ogt, %11, %12 : vector<16x128xf32>
    %14 = arith.extui %13 : vector<16x128xi1> to vector<16x128xi32>
    %15 = arith.sitofp %14 : vector<16x128xi32> to vector<16x128xf32>
    %16 = arith.index_cast %c0_i32_2 : i32 to index
    %c0_7 = arith.constant 0 : index
    %c0_8 = arith.constant 0 : index
    %17 = vector.load %arg3[%16, %c0_7, %c0_8] : memref<4x16x128xf32, #tpu.memory_space<vmem>>, vector<1x16x128xf32>
    %18 = vector.shape_cast %17 : vector<1x16x128xf32> to vector<16x128xf32>
    %19 = vector.shape_cast %15 : vector<16x128xf32> to vector<1x16x128xf32>
    tpu.vector_store %arg3[%16, %c0_7, %c0_8], %19 {strides = array<i32>} : memref<4x16x128xf32, #tpu.memory_space<vmem>>, vector<1x16x128xf32>,
    %cst_9 = arith.constant 1.000000e+00 : f32
    %20 = vector.broadcast %cst_9 : f32 to vector<16x128xf32>
    %21 = arith.mulf %20, %15 : vector<16x128xf32>
    %22 = arith.subf %11, %21 : vector<16x128xf32>
    %c1_i32 = arith.constant 1 : i32
    %23 = arith.index_cast %c1_i32 : i32 to index
    %c0_10 = arith.constant 0 : index
    %c0_11 = arith.constant 0 : index
    %24 = vector.load %arg2[%23, %c0_10, %c0_11] : memref<4x16x128xf32, #tpu.memory_space<vmem>>, vector<1x16x128xf32>
    %25 = vector.shape_cast %24 : vector<1x16x128xf32> to vector<16x128xf32>
    %cst_12 = arith.constant 0.975309908 : f32
    %26 = vector.broadcast %cst_12 : f32 to vector<16x128xf32>
    %27 = arith.mulf %26, %22 : vector<16x128xf32>
    %cst_13 = arith.constant 0.0246900879 : f32
    %28 = vector.broadcast %cst_13 : f32 to vector<16x128xf32>
    %29 = arith.mulf %28, %25 : vector<16x128xf32>
    %30 = arith.addf %27, %29 : vector<16x128xf32>
    %cst_14 = arith.constant 1.000000e+00 : f32
    %31 = vector.broadcast %cst_14 : f32 to vector<16x128xf32>
    %32 = arith.cmpf ogt, %30, %31 : vector<16x128xf32>
    %33 = arith.extui %32 : vector<16x128xi1> to vector<16x128xi32>
    %34 = arith.sitofp %33 : vector<16x128xi32> to vector<16x128xf32>
    %35 = arith.index_cast %c1_i32 : i32 to index
    %c0_15 = arith.constant 0 : index
    %c0_16 = arith.constant 0 : index
    %36 = vector.load %arg3[%35, %c0_15, %c0_16] : memref<4x16x128xf32, #tpu.memory_space<vmem>>, vector<1x16x128xf32>
    %37 = vector.shape_cast %36 : vector<1x16x128xf32> to vector<16x128xf32>
    %38 = vector.shape_cast %34 : vector<16x128xf32> to vector<1x16x128xf32>
    tpu.vector_store %arg3[%35, %c0_15, %c0_16], %38 {strides = array<i32>} : memref<4x16x128xf32, #tpu.memory_space<vmem>>, vector<1x16x128xf32>,
    %cst_17 = arith.constant 1.000000e+00 : f32
    %39 = vector.broadcast %cst_17 : f32 to vector<16x128xf32>
    %40 = arith.mulf %39, %34 : vector<16x128xf32>
    %41 = arith.subf %30, %40 : vector<16x128xf32>
    %c2_i32 = arith.constant 2 : i32
    %42 = arith.index_cast %c2_i32 : i32 to index
    %c0_18 = arith.constant 0 : index
    %c0_19 = arith.constant 0 : index
    %43 = vector.load %arg2[%42, %c0_18, %c0_19] : memref<4x16x128xf32, #tpu.memory_space<vmem>>, vector<1x16x128xf32>
    %44 = vector.shape_cast %43 : vector<1x16x128xf32> to vector<16x128xf32>
    %cst_20 = arith.constant 0.975309908 : f32
    %45 = vector.broadcast %cst_20 : f32 to vector<16x128xf32>
    %46 = arith.mulf %45, %41 : vector<16x128xf32>
    %cst_21 = arith.constant 0.0246900879 : f32
    %47 = vector.broadcast %cst_21 : f32 to vector<16x128xf32>
    %48 = arith.mulf %47, %44 : vector<16x128xf32>
    %49 = arith.addf %46, %48 : vector<16x128xf32>
    %cst_22 = arith.constant 1.000000e+00 : f32
    %50 = vector.broadcast %cst_22 : f32 to vector<16x128xf32>
    %51 = arith.cmpf ogt, %49, %50 : vector<16x128xf32>
    %52 = arith.extui %51 : vector<16x128xi1> to vector<16x128xi32>
    %53 = arith.sitofp %52 : vector<16x128xi32> to vector<16x128xf32>
    %54 = arith.index_cast %c2_i32 : i32 to index
    %c0_23 = arith.constant 0 : index
    %c0_24 = arith.constant 0 : index
    %55 = vector.load %arg3[%54, %c0_23, %c0_24] : memref<4x16x128xf32, #tpu.memory_space<vmem>>, vector<1x16x128xf32>
    %56 = vector.shape_cast %55 : vector<1x16x128xf32> to vector<16x128xf32>
    %57 = vector.shape_cast %53 : vector<16x128xf32> to vector<1x16x128xf32>
    tpu.vector_store %arg3[%54, %c0_23, %c0_24], %57 {strides = array<i32>} : memref<4x16x128xf32, #tpu.memory_space<vmem>>, vector<1x16x128xf32>,
    %cst_25 = arith.constant 1.000000e+00 : f32
    %58 = vector.broadcast %cst_25 : f32 to vector<16x128xf32>
    %59 = arith.mulf %58, %53 : vector<16x128xf32>
    %60 = arith.subf %49, %59 : vector<16x128xf32>
    %c3_i32 = arith.constant 3 : i32
    %61 = arith.index_cast %c3_i32 : i32 to index
    %c0_26 = arith.constant 0 : index
    %c0_27 = arith.constant 0 : index
    %62 = vector.load %arg2[%61, %c0_26, %c0_27] : memref<4x16x128xf32, #tpu.memory_space<vmem>>, vector<1x16x128xf32>
    %63 = vector.shape_cast %62 : vector<1x16x128xf32> to vector<16x128xf32>
    %cst_28 = arith.constant 0.975309908 : f32
    %64 = vector.broadcast %cst_28 : f32 to vector<16x128xf32>
    %65 = arith.mulf %64, %60 : vector<16x128xf32>
    %cst_29 = arith.constant 0.0246900879 : f32
    %66 = vector.broadcast %cst_29 : f32 to vector<16x128xf32>
    %67 = arith.mulf %66, %63 : vector<16x128xf32>
    %68 = arith.addf %65, %67 : vector<16x128xf32>
    %cst_30 = arith.constant 1.000000e+00 : f32
    %69 = vector.broadcast %cst_30 : f32 to vector<16x128xf32>
    %70 = arith.cmpf ogt, %68, %69 : vector<16x128xf32>
    %71 = arith.extui %70 : vector<16x128xi1> to vector<16x128xi32>
    %72 = arith.sitofp %71 : vector<16x128xi32> to vector<16x128xf32>
    %73 = arith.index_cast %c3_i32 : i32 to index
    %c0_31 = arith.constant 0 : index
    %c0_32 = arith.constant 0 : index
    %74 = vector.load %arg3[%73, %c0_31, %c0_32] : memref<4x16x128xf32, #tpu.memory_space<vmem>>, vector<1x16x128xf32>
    %75 = vector.shape_cast %74 : vector<1x16x128xf32> to vector<16x128xf32>
    %76 = vector.shape_cast %72 : vector<16x128xf32> to vector<1x16x128xf32>
    tpu.vector_store %arg3[%73, %c0_31, %c0_32], %76 {strides = array<i32>} : memref<4x16x128xf32, #tpu.memory_space<vmem>>, vector<1x16x128xf32>,
    %cst_33 = arith.constant 1.000000e+00 : f32
    %77 = vector.broadcast %cst_33 : f32 to vector<16x128xf32>
    %78 = arith.mulf %77, %72 : vector<16x128xf32>
    %79 = arith.subf %68, %78 : vector<16x128xf32>
    %c4_i32 = arith.constant 4 : i32
    %c0_34 = arith.constant 0 : index
    %c0_35 = arith.constant 0 : index
    %80 = vector.load %arg4[%c0_34, %c0_35] : memref<16x128xf32, #tpu.memory_space<vmem>>, vector<16x128xf32>
    tpu.vector_store %arg4[%c0_34, %c0_35], %79 {strides = array<i32>} : memref<16x128xf32, #tpu.memory_space<vmem>>, vector<16x128xf32>,
    return
  }
  func.func @transform_0(%arg0: i32, %arg1: i32) -> (i32, i32, i32) {
    %c0_i32 = arith.constant 0 : i32
    %c0_i32_0 = arith.constant 0 : i32
    return %arg1, %arg0, %c0_i32 : i32, i32, i32
  }
  func.func @transform_1(%arg0: i32, %arg1: i32) -> (i32, i32, i32) {
    %c0_i32 = arith.constant 0 : i32
    %c0_i32_0 = arith.constant 0 : i32
    return %arg1, %arg0, %c0_i32 : i32, i32, i32
  }
}

</mosaic_0001>

<llo_original>
// kernel: tpu_custom_call.1
$region0: #{tpu_custom_call.1}
  #allocation0 [shape = 'u32[]', space=smem, size = 0x4, offset = 0x4, fixed_abs, tag = 'smem constant byte address 0x4 - core index']
  #allocation1 [shape = 'u32[144,128]{1,0:T(1,128)}', space=vmem, size = 0x12000, scoped, tag = 'internal scratch']
  #allocation2 [shape = 'f32[16,128]{1,0:T(8,128)}', space=vmem, size = 0x2000, scoped, tag = 'scratch operand']
  #allocation7 [shape = 's32[]', space=sflag, size = 0x4, offset = 0, fixed_abs, tag = 'sflag constant byte address 0x0 - dummy sync flag']
  #allocation9 [shape = 's32[]', space=sflag, size = 0x4, offset = 0, fixed_abs, tag = 'sflag constant byte address 0x0 - dummy sync flag']
  %s0 = inlined_call_operand.hbm [shape: f32[16,32,128], index: 0, kind: input, shape index: {}]
  %s1 = inlined_call_operand.hbm [shape: f32[16,32,128], index: 1, kind: output, shape index: {}]
  %s2 = sld [smem:[#allocation0]]
  $region45: #{tpu_custom_call.1} parent=0
    _
  %s4 = ssub.s32 1, %s2
  %s5 = scalar_select 0, %s4, %s2
  $region1: #{tpu_custom_call.1} parent=0
    #allocation3 [shape = 'u8[65536]{0}', space=vmem, size = 0x10000, scoped, tag = 'input window, operand 0']
    #allocation4 [shape = 's32[2]{0}', space=sflag, size = 0x8, scoped, tag = 'scoped memory for tpu_custom_call.1']
    #allocation5 [shape = 's32[2]{0}', space=sflag, size = 0x8, scoped, tag = 'scoped memory for tpu_custom_call.1']
    #allocation6 [shape = 'u8[65536]{0}', space=vmem, size = 0x10000, scoped, tag = 'output window, operand 0']
    %6 = vsyncpa [#allocation4], 0
    %s7 = scalar_lea.sflag [#allocation4], 1
    %8 = vsyncpa %s7, 0
    %9 = vsyncpa [#allocation5], 0
    %s10 = scalar_lea.sflag [#allocation5], 1
    %11 = vsyncpa %s10, 0
    loop: start=0, step=1, limit=10
    $region2: #{tpu_custom_call.1} parent=1 // loop_pre_header
      _
    $region3: #{tpu_custom_call.1} parent=1 // loop_header
      %s13 = sphi 0, %s17
      %p14 = scmp.ge.s32.totalorder %s13, 10
      %s20 = sphi 0, %s32
      %s21 = sphi 0, %s28
      %s22 = sphi 0, %s20
      %s23 = sphi 0, %s21
      %s24 = sphi 0, %s22
      %s25 = sphi 0, %s23
      %s37 = sphi 0, %s39
      %s40 = sphi 0, %s37
      %s41 = sphi 0, %s40
      %s57 = sphi 0, %s41
      %s65 = sphi 0, %s67
      %s68 = sphi 0, %s65
      %s69 = sphi 0, %s68
      %s85 = sphi 0, %s69
    $region4: #{tpu_custom_call.1} parent=1 // loop_header_branch
      %16 = sbr.rel (%p14) target = $region8
    $region5: #{tpu_custom_call.1} parent=1 // loop_body
      %s18 = ssub.s32 %s13, 1
      %s19 = ssub.s32 %s13, 2
      %s26 = sadd.s32 1, %s21
      %p27 = scmp.ge.s32.totalorder %s26, 4
      %s28 = scalar_select %p27, 0, %s26
      %s29 = sadd.s32 1, %s20
      %s30 = scalar_select %p27, %s29, %s20
      %p31 = scmp.ge.s32.totalorder %s30, 2
      %s32 = scalar_select %p31, 0, %s30
      %s33 = ssub.s32 %s21, %s28
      %s34 = ssub.s32 %s20, %s32
      %s35 = sor.u32 %s33, %s34
      %p36 = scmp.eq.s32.totalorder %s35, 0
      %s38 = sadd.s32 %s37, 1
      %s39 = scalar_select %p36, %s37, %s38
      %p42 = pneg %p36
      %p43 = scmp.eq.s32.totalorder %s13, 7
      %p44 = por %p42, %p43
      %p45 = scmp.ne.s32.totalorder %s37, %s40
      %p46 = scmp.eq.s32.totalorder %s13, 0
      %p47 = por %p45, %p46
      %p48 = scmp.ne.s32.totalorder %s37, %s40
      %p49 = scmp.eq.s32.totalorder %s18, 7
      %p50 = por %p48, %p49
      %p51 = scmp.ne.s32.totalorder %s40, %s41
      %p52 = scmp.eq.s32.totalorder %s18, 0
      %p53 = por %p51, %p52
      %p54 = scmp.ne.s32.totalorder %s40, %s41
      %p55 = scmp.eq.s32.totalorder %s19, 7
      %p56 = por %p54, %p55
      %p58 = scmp.ne.s32.totalorder %s41, %s57
      %p59 = scmp.eq.s32.totalorder %s19, 0
      %p60 = por %p58, %p59
      %s61 = ssub.s32 %s21, %s28
      %s62 = ssub.s32 %s20, %s32
      %s63 = sor.u32 %s61, %s62
      %p64 = scmp.eq.s32.totalorder %s63, 0
      %s66 = sadd.s32 %s65, 1
      %s67 = scalar_select %p64, %s65, %s66
      %p70 = pneg %p64
      %p71 = scmp.eq.s32.totalorder %s13, 7
      %p72 = por %p70, %p71
      %p73 = scmp.ne.s32.totalorder %s65, %s68
      %p74 = scmp.eq.s32.totalorder %s13, 0
      %p75 = por %p73, %p74
      %p76 = scmp.ne.s32.totalorder %s65, %s68
      %p77 = scmp.eq.s32.totalorder %s18, 7
      %p78 = por %p76, %p77
      %p79 = scmp.ne.s32.totalorder %s68, %s69
      %p80 = scmp.eq.s32.totalorder %s18, 0
      %p81 = por %p79, %p80
      %p82 = scmp.ne.s32.totalorder %s68, %s69
      %p83 = scmp.eq.s32.totalorder %s19, 7
      %p84 = por %p82, %p83
      %p86 = scmp.ne.s32.totalorder %s69, %s85
      %p87 = scmp.eq.s32.totalorder %s19, 0
      %p88 = por %p86, %p87
      %p89 = scmp.le.s32.totalorder 1, %s13
      %p90 = scmp.lt.s32.totalorder %s13, 9
      %p91 = pnand %p89, %p90
      %p92 = pneg %p91
      // Predicated region
      $region9: #{tpu_custom_call.1} parent=5 // pred_check
        _
      $region10: #{tpu_custom_call.1} parent=5 // pred_check_branch
        %94 = sbr.rel (%p91) target = $region12
      $region11: #{tpu_custom_call.1} parent=5 // pred_region
        %s95 = ssub.s32 %s13, 1
      $region12: #{tpu_custom_call.1} parent=5 // pred_fallthru
        _
      %p96 = scmp.lt.s32.totalorder %s13, 8
      // Predicated region
      $region13: #{tpu_custom_call.1} parent=5 // pred_check
        %p97 = pneg %p96
      $region14: #{tpu_custom_call.1} parent=5 // pred_check_branch
        %99 = sbr.rel (%p97) target = $region16
      $region15: #{tpu_custom_call.1} parent=5 // pred_region
        // Predicated region
        $region17: #{tpu_custom_call.1} parent=15 // pred_check
          %p100 = pneg %p47
        $region18: #{tpu_custom_call.1} parent=15 // pred_check_branch
          %102 = sbr.rel (%p100) target = $region20
        $region19: #{tpu_custom_call.1} parent=15 // pred_region
          #allocation8 [shape = 'u32[6]{0}', space=smem, size = 0x18, scoped, tag = 'DMA stride descriptor']
          %s103 = sand.u32 %s37, 1
          %s104 = scalar_lea.sflag [#allocation4], %s103
          %s105 = sand.u32 %s37, 1
          %s106 = smul.addr %s105, 64
          %s107 = scalar_lea.vmem [#allocation3], %s106
          %s108 = smul.u32 4, %s21
          %s109 = smul.u32 2, %s20
          %s111 = ssub.s32 1024, 1024
          %112 = vsyncadd %s104, %s111
          %s113 = smul.addr %s108, 4
          %s114 = sadd.s32 %s109, %s113
          %s115 = smul.addr %s114, 128
          %s116 = scalar_lea.hbm %s0, %s115
          %s118 = sshll.u32 1, 14
          %s119 = sxor.u32 4294967295, %s118
          %s121 = sld [smem:[#allocation0]]
          %s122 = sadd.s32 2, %s121
          %s124 = sshll.u32 7, 26
          %s125 = sxor.u32 4294967295, %s124
          %s126 = sand.u32 0, %s125
          %s127 = sshll.u32 %s122, 26
          %s128 = sor.u32 %s126, %s127
          %s129 = sshll.u32 %s107, 4
          %s130 = int_to_ptr.vmem [resolvable:$true] %s129
          %136 = sst [smem:[#allocation8]] 512
          %s137 = scalar_lea.smem [#allocation8], 1
          %138 = sst [smem:[%s137]] 256
          %s139 = scalar_lea.smem [#allocation8], 2
          %140 = sst [smem:[%s139]] 2
          %s141 = scalar_lea.smem [#allocation8], 3
          %142 = sst [smem:[%s141]] 128
          %s143 = scalar_lea.smem [#allocation8], 4
          %144 = sst [smem:[%s143]] 128
          %s145 = scalar_lea.smem [#allocation8], 5
          %146 = sst [smem:[%s145]] 8
          %148 = dma.general %s116, 1024, %s130, %s104, [#allocation7], [#allocation8], %s128, 0
        $region20: #{tpu_custom_call.1} parent=15 // pred_fallthru
          _
      $region16: #{tpu_custom_call.1} parent=5 // pred_fallthru
        _
      %p149 = scmp.le.s32.totalorder 1, %s13
      %p150 = scmp.lt.s32.totalorder %s13, 9
      %p151 = pnand %p149, %p150
      %p152 = pneg %p151
      // Predicated region
      $region21: #{tpu_custom_call.1} parent=5 // pred_check
        _
      $region22: #{tpu_custom_call.1} parent=5 // pred_check_branch
        %154 = sbr.rel (%p151) target = $region24
      $region23: #{tpu_custom_call.1} parent=5 // pred_region
        %s155 = ssub.s32 %s13, 1
        %s156 = sand.u32 %s40, 1
        %s157 = scalar_lea.sflag [#allocation4], %s156
        %s158 = sand.u32 %s40, 1
        %s159 = smul.addr %s158, 64
        %s160 = scalar_lea.vmem [#allocation3], %s159
        // Predicated region
        $region25: #{tpu_custom_call.1} parent=23 // pred_check
          %p161 = pneg %p53
        $region26: #{tpu_custom_call.1} parent=23 // pred_check_branch
          %163 = sbr.rel (%p161) target = $region28
        $region27: #{tpu_custom_call.1} parent=23 // pred_region
          %164 = dma.done %s157, 1024
        $region28: #{tpu_custom_call.1} parent=23 // pred_fallthru
          _
        %s165 = sand.u32 %s40, 1
        %s166 = scalar_lea.sflag [#allocation4], %s165
        %s167 = sand.u32 %s40, 1
        %s168 = smul.addr %s167, 64
        %s169 = scalar_lea.vmem [#allocation3], %s168
        %p170 = pneg %p53
        %p171 = pneg %p50
        %p172 = pneg %p81
        %p173 = pneg %p78
        %s174 = sand.u32 %s68, 1
        %s175 = scalar_lea.sflag [#allocation5], %s174
        %s176 = sand.u32 %s68, 1
        %s177 = smul.addr %s176, 64
        %s178 = scalar_lea.vmem [#allocation6], %s177
        %s179 = smul.u32 4, %s23
        %s180 = smul.u32 2, %s22
        %s181 = smul.u32 4, %s23
        %s182 = smul.u32 2, %s22
        %p183 = scmp.eq.s32.totalorder %s23, 0
        // Predicated region
        $region29: #{tpu_custom_call.1} parent=23 // pred_check
          %p184 = pneg %p183
        $region30: #{tpu_custom_call.1} parent=23 // pred_check_branch
          %186 = sbr.rel (%p184) target = $region32
        $region31: #{tpu_custom_call.1} parent=23 // pred_region
          %187 = vst [vmem:[#allocation2] sm:$0xff] 0.0
          %188 = vst [vmem:[#allocation2 + $0x8] sm:$0xff] 0.0
        $region32: #{tpu_custom_call.1} parent=23 // pred_fallthru
          _
        %v189 = vld [vmem:[#allocation2] sm:$0xff]
        %v190 = vld [vmem:[#allocation2 + $0x8] sm:$0xff]
        %v191 = vld [vmem:[%s160] sm:$0xff]
        %v192 = vld [vmem:[%s160 + $0x8] sm:$0xff]
        %v193 = vmul.f32 %v189, 0.9753099
        %v194 = vmul.f32 %v190, 0.9753099
        %v195 = vmul.f32 %v191, 0.024690088
        %v196 = vmul.f32 %v192, 0.024690088
        %v197 = vadd.f32 %v193, %v195
        %v198 = vadd.f32 %v194, %v196
        %vm199 = vcmp.gt.f32.partialorder %v197, 1.0
        %vm200 = vcmp.gt.f32.partialorder %v198, 1.0
        %v201 = vsel %vm199, 1, 0
        %v202 = vsel %vm200, 1, 0
        %v203 = vcvt.s32.f32 %v201
        %v204 = vcvt.s32.f32 %v202
        %205 = vst [vmem:[%s178] sm:$0xff] %v203
        %206 = vst [vmem:[%s178 + $0x8] sm:$0xff] %v204
        %v207 = vsub.f32 %v197, %v203
        %v208 = vsub.f32 %v198, %v204
        %s209 = scalar_lea.vmem %s160, 16 [#allocation3]
        %v210 = vld [vmem:[%s209] sm:$0xff]
        %v211 = vld [vmem:[%s209 + $0x8] sm:$0xff]
        %v212 = vmul.f32 %v207, 0.9753099
        %v213 = vmul.f32 %v208, 0.9753099
        %v214 = vmul.f32 %v210, 0.024690088
        %v215 = vmul.f32 %v211, 0.024690088
        %v216 = vadd.f32 %v212, %v214
        %v217 = vadd.f32 %v213, %v215
        %vm218 = vcmp.gt.f32.partialorder %v216, 1.0
        %vm219 = vcmp.gt.f32.partialorder %v217, 1.0
        %v220 = vsel %vm218, 1, 0
        %v221 = vsel %vm219, 1, 0
        %v222 = vcvt.s32.f32 %v220
        %v223 = vcvt.s32.f32 %v221
        %s224 = scalar_lea.vmem %s178, 16 [#allocation6]
        %225 = vst [vmem:[%s224] sm:$0xff] %v222
        %226 = vst [vmem:[%s224 + $0x8] sm:$0xff] %v223
        %v227 = vsub.f32 %v216, %v222
        %v228 = vsub.f32 %v217, %v223
        %s229 = scalar_lea.vmem %s160, 32 [#allocation3]
        %v230 = vld [vmem:[%s229] sm:$0xff]
        %v231 = vld [vmem:[%s229 + $0x8] sm:$0xff]
        %v232 = vmul.f32 %v227, 0.9753099
        %v233 = vmul.f32 %v228, 0.9753099
        %v234 = vmul.f32 %v230, 0.024690088
        %v235 = vmul.f32 %v231, 0.024690088
        %v236 = vadd.f32 %v232, %v234
        %v237 = vadd.f32 %v233, %v235
        %vm238 = vcmp.gt.f32.partialorder %v236, 1.0
        %vm239 = vcmp.gt.f32.partialorder %v237, 1.0
        %v240 = vsel %vm238, 1, 0
        %v241 = vsel %vm239, 1, 0
        %v242 = vcvt.s32.f32 %v240
        %v243 = vcvt.s32.f32 %v241
        %s244 = scalar_lea.vmem %s178, 32 [#allocation6]
        %245 = vst [vmem:[%s244] sm:$0xff] %v242
        %246 = vst [vmem:[%s244 + $0x8] sm:$0xff] %v243
        %v247 = vsub.f32 %v236, %v242
        %v248 = vsub.f32 %v237, %v243
        %s249 = scalar_lea.vmem %s160, 48 [#allocation3]
        %v250 = vld [vmem:[%s249] sm:$0xff]
        %v251 = vld [vmem:[%s249 + $0x8] sm:$0xff]
        %v252 = vmul.f32 %v247, 0.9753099
        %v253 = vmul.f32 %v248, 0.9753099
        %v254 = vmul.f32 %v250, 0.024690088
        %v255 = vmul.f32 %v251, 0.024690088
        %v256 = vadd.f32 %v252, %v254
        %v257 = vadd.f32 %v253, %v255
        %vm258 = vcmp.gt.f32.partialorder %v256, 1.0
        %vm259 = vcmp.gt.f32.partialorder %v257, 1.0
        %v260 = vsel %vm258, 1, 0
        %v261 = vsel %vm259, 1, 0
        %v262 = vcvt.s32.f32 %v260
        %v263 = vcvt.s32.f32 %v261
        %s264 = scalar_lea.vmem %s178, 48 [#allocation6]
        %265 = vst [vmem:[%s264] sm:$0xff] %v262
        %266 = vst [vmem:[%s264 + $0x8] sm:$0xff] %v263
        %v267 = vsub.f32 %v256, %v262
        %v268 = vsub.f32 %v257, %v263
        %269 = vst [vmem:[#allocation2] sm:$0xff] %v267
        %270 = vst [vmem:[#allocation2 + $0x8] sm:$0xff] %v268
        %s271 = sand.u32 %s68, 1
        %s272 = scalar_lea.sflag [#allocation5], %s271
        %s273 = sand.u32 %s68, 1
        %s274 = smul.addr %s273, 64
        %s275 = scalar_lea.vmem [#allocation6], %s274
        // Predicated region
        $region33: #{tpu_custom_call.1} parent=23 // pred_check
          %p276 = pneg %p78
        $region34: #{tpu_custom_call.1} parent=23 // pred_check_branch
          %278 = sbr.rel (%p276) target = $region36
        $region35: #{tpu_custom_call.1} parent=23 // pred_region
          #allocation10 [shape = 'u32[6]{0}', space=smem, size = 0x18, scoped, tag = 'DMA stride descriptor']
          %s279 = smul.u32 4, %s23
          %s280 = smul.u32 2, %s22
          %s282 = ssub.s32 1024, 1024
          %283 = vsyncadd %s272, %s282
          %s284 = smul.addr %s279, 4
          %s285 = sadd.s32 %s280, %s284
          %s286 = smul.addr %s285, 128
          %s287 = scalar_lea.hbm %s1, %s286
          %s289 = sshll.u32 1, 14
          %s290 = sxor.u32 4294967295, %s289
          %s293 = sshll.u32 7, 18
          %s294 = sxor.u32 4294967295, %s293
          %s295 = sand.u32 0, %s294
          %s297 = sor.u32 %s295, 0
          %s299 = sshll.u32 3, 24
          %s300 = sxor.u32 4294967295, %s299
          %s301 = sand.u32 %s297, %s300
          %s303 = sor.u32 %s301, 0
          %s304 = sshll.u32 %s275, 4
          %s305 = int_to_ptr.vmem [resolvable:$true] %s304
          %311 = sst [smem:[#allocation10]] 256
          %s312 = scalar_lea.smem [#allocation10], 1
          %313 = sst [smem:[%s312]] 512
          %s314 = scalar_lea.smem [#allocation10], 2
          %315 = sst [smem:[%s314]] 2
          %s316 = scalar_lea.smem [#allocation10], 3
          %317 = sst [smem:[%s316]] 128
          %s318 = scalar_lea.smem [#allocation10], 4
          %319 = sst [smem:[%s318]] 128
          %s320 = scalar_lea.smem [#allocation10], 5
          %321 = sst [smem:[%s320]] 8
          %323 = dma.general %s305, 1024, %s287, %s272, [#allocation9], [#allocation10], %s303, 0
        $region36: #{tpu_custom_call.1} parent=23 // pred_fallthru
          _
      $region24: #{tpu_custom_call.1} parent=5 // pred_fallthru
        _
      %p324 = scmp.le.s32.totalorder 2, %s13
      // Predicated region
      $region37: #{tpu_custom_call.1} parent=5 // pred_check
        %p325 = pneg %p324
      $region38: #{tpu_custom_call.1} parent=5 // pred_check_branch
        %327 = sbr.rel (%p325) target = $region40
      $region39: #{tpu_custom_call.1} parent=5 // pred_region
        %s328 = ssub.s32 %s13, 2
        // Predicated region
        $region41: #{tpu_custom_call.1} parent=39 // pred_check
          %p329 = pneg %p84
        $region42: #{tpu_custom_call.1} parent=39 // pred_check_branch
          %331 = sbr.rel (%p329) target = $region44
        $region43: #{tpu_custom_call.1} parent=39 // pred_region
          %s332 = sand.u32 %s69, 1
          %s333 = scalar_lea.sflag [#allocation5], %s332
          %s334 = sand.u32 %s69, 1
          %s335 = smul.addr %s334, 64
          %s336 = scalar_lea.vmem [#allocation6], %s335
          %337 = dma.done %s333, 1024
        $region44: #{tpu_custom_call.1} parent=39 // pred_fallthru
          _
      $region40: #{tpu_custom_call.1} parent=5 // pred_fallthru
        _
    $region6: #{tpu_custom_call.1} parent=1 // loop_footer
      %s17 = sadd.s32 1, %s13
    $region7: #{tpu_custom_call.1} parent=1 // loop_footer_branch
      %12 = sbr.rel target = $region3
    $region8: #{tpu_custom_call.1} parent=1 // loop_exit
      _
    %338 = vsyncpa [#allocation4], 1
    %s339 = scalar_lea.sflag [#allocation4], 1
    %340 = vsyncpa %s339, 1
    %341 = vsyncpa [#allocation5], 1
    %s342 = scalar_lea.sflag [#allocation5], 1
    %343 = vsyncpa %s342, 1

</llo_original>
